<compile_context>
chip_gen: v6e
topology: v6e:2x2x1
jax: 0.10.0
libtpu: 0.0.40
codegen_flags: <defaults>
</compile_context>

<pallas_src>
import functools

import jax
import jax.numpy as jnp
from jax.experimental import pallas as pl
from jax.experimental.pallas import tpu as pltpu

_LN2 = 0.6931471805599453


def _softplus(z):
    # Module activation: relu(z) + log(0.5*exp(-|z|) + 0.5) == relu(z) + log1p(exp(-|z|)) - ln2.
    # The -ln2 is folded into the next layer's bias in the wrapper (exact algebra),
    # so the kernel only evaluates relu + log1p.
    return jnp.maximum(z, 0.0) + jnp.log1p(jnp.exp(-jnp.abs(z)))


def _make_kernel(compute_dtype):
    def kernel(x_ref, w1_ref, b1_ref, w2_ref, b2_ref, w3_ref, b3_ref, o_ref):
        x = x_ref[...]
        if compute_dtype is not None:
            # Cast inside the kernel: HBM traffic unchanged (a wrapper-side astype
            # would be an extra full HBM read+write of x -- review item 4).
            x = x.astype(compute_dtype)
        z = jnp.dot(x, w1_ref[...], preferred_element_type=jnp.float32) + b1_ref[...]
        if compute_dtype is not None:
            z = z.astype(compute_dtype)  # bf16 EUP runs ~2x f32 on v6e/v7x (item 5)
        h = _softplus(z)
        z = jnp.dot(h, w2_ref[...], preferred_element_type=jnp.float32) + b2_ref[...]
        if compute_dtype is not None:
            z = z.astype(compute_dtype)
        h = _softplus(z)
        z = jnp.dot(h, w3_ref[...], preferred_element_type=jnp.float32) + b3_ref[...]
        o_ref[...] = z.astype(o_ref.dtype)

    return kernel


def out_forward(x, params, *, tb=32768, pack=None, compute_dtype=None):
    """Forward pass of the `out` module.

    x: [B, in_ftr].  params: w{1,2,3} stored [din, dout], b{1,2,3} stored [1, dout].
    Returns [B, out_ftr] float32 (same layout as the PyTorch module).
    """
    w1, b1, w2, b2, w3, b3 = (params[k] for k in ("w1", "b1", "w2", "b2", "w3", "b3"))
    B, in_ftr = x.shape
    h1_dim, h2_dim, out_dim = w1.shape[1], w2.shape[1], w3.shape[1]

    # Row-packing factor: pack consecutive batch rows onto the lane axis so the
    # streamed x block, the activations and the output are lane-dense and there is
    # zero in-kernel relayout.  pack=8 -> h1 activation is exactly 128 lanes wide.
    if pack is None:
        pack = next(p for p in (8, 4, 2, 1) if B % p == 0)
    assert B % pack == 0, "pack must divide the batch size"

    # Fold the softplus constant -ln2 into the downstream biases (exact algebra).
    b2 = b2 - _LN2 * jnp.sum(w2, axis=0, keepdims=True)
    b3 = b3 - _LN2 * jnp.sum(w3, axis=0, keepdims=True)

    # Block-diagonal ("packed") weights: y_packed = x_packed @ kron(I_pack, W).
    def packed(w, b):
        wp = jnp.kron(jnp.eye(pack, dtype=w.dtype), w)   # [din*pack, dout*pack]
        bp = jnp.tile(b, (1, pack))                      # [1,  dout*pack]
        return wp, bp

    w1p, b1p = packed(w1, b1)
    w2p, b2p = packed(w2, b2)
    w3p, b3p = packed(w3, b3)
    if compute_dtype is not None:
        w1p, w2p, w3p = (w.astype(compute_dtype) for w in (w1p, w2p, w3p))

    rows = B // pack
    x_r = x.reshape(rows, in_ftr * pack)   # contiguous merge -> free, no HBM pass

    # Batch tiling: big tiles amortize the ~0.35us/grid-step overhead, but keep at
    # least 2 tiles so both v7x TensorCores get work (the grid axis is "parallel").
    max_tile_rows = max(8, tb // pack)
    if rows <= 8:
        tile_rows = rows                               # full-dim block (always legal)
    else:
        n_tiles = -(-rows // max_tile_rows)
        if n_tiles == 1 and rows >= 16:
            n_tiles = 2                                # never collapse to one tile
        tile_rows = -(-rows // n_tiles)
        tile_rows = max(8, ((tile_rows + 7) // 8) * 8)  # sublane aligned
    grid = (-(-rows // tile_rows),)

    # Explicit VMEM budget (v5e's default scoped limit is only 16 MiB -- item 9).
    lanes = 128
    pad = lambda c: -(-c // lanes) * lanes
    itemsize = x.dtype.itemsize
    x_tile_b = tile_rows * pad(in_ftr * pack) * itemsize
    o_tile_b = tile_rows * pad(out_dim * pack) * 4
    act_b = tile_rows * (pad(h1_dim * pack) + pad(h2_dim * pack)) * 4
    wgt_b = 4 * pack * pack * (in_ftr * h1_dim + h1_dim * h2_dim + h2_dim * out_dim)
    vmem_limit = int(2 * (x_tile_b + o_tile_b) + 4 * act_b + 2 * wgt_b + (4 << 20))
    vmem_limit = min(max(vmem_limit, 32 << 20), 64 << 20)

    cost = pl.CostEstimate(
        # Packed (block-diagonal) matmuls execute `pack`x redundant MACs (MXU ~1% busy).
        flops=2 * B * pack * (in_ftr * h1_dim + h1_dim * h2_dim + h2_dim * out_dim),
        # exp + log1p per activation element (~2x the previous estimate, per review).
        transcendentals=4 * B * (h1_dim + h2_dim),
        bytes_accessed=(x_r.size * itemsize + B * out_dim * 4
                        + sum(a.size * a.dtype.itemsize
                              for a in (w1p, b1p, w2p, b2p, w3p, b3p))),
    )

    # Weights/biases: full block, constant index -> loaded once, VMEM-resident.
    resident = lambda a: pl.BlockSpec(a.shape, lambda i: (0,) * a.ndim)

    out_r = pl.pallas_call(
        _make_kernel(compute_dtype),
        out_shape=jax.ShapeDtypeStruct((rows, out_dim * pack), jnp.float32),
        grid=grid,
        in_specs=[
            pl.BlockSpec((tile_rows, in_ftr * pack), lambda i: (i, 0)),  # x streams
            resident(w1p), resident(b1p),
            resident(w2p), resident(b2p),
            resident(w3p), resident(b3p),
        ],
        out_specs=pl.BlockSpec((tile_rows, out_dim * pack), lambda i: (i, 0)),
        compiler_params=pltpu.CompilerParams(
            dimension_semantics=("parallel",),
            vmem_limit_bytes=vmem_limit),
        cost_estimate=cost,
    )(x_r, w1p, b1p, w2p, b2p, w3p, b3p)

    # [rows, out*pack] is row-major contiguous == [B, out]: free reshape, no HBM pass.
    return out_r.reshape(B, out_dim)


def init_params(key, in_ftr, out_ftr, dtype=jnp.float32):
    """Deterministic init mimicking nn.Linear (uniform +/- 1/sqrt(fan_in)); weights [in, out]."""
    dims = [(in_ftr, in_ftr // 2), (in_ftr // 2, in_ftr // 4), (in_ftr // 4, out_ftr)]
    params = {}
    keys = jax.random.split(key, 2 * len(dims))
    for i, (din, dout) in enumerate(dims):
        bound = 1.0 / jnp.sqrt(jnp.asarray(din, dtype))
        params[f"w{i+1}"] = jax.random.uniform(
            keys[2 * i], (din, dout), dtype, minval=-bound, maxval=bound)
        params[f"b{i+1}"] = jax.random.uniform(
            keys[2 * i + 1], (1, dout), dtype, minval=-bound, maxval=bound)
    return params


def reference_forward(x, params):
    def sp(z):
        return jnp.maximum(z, 0.0) + jnp.log(0.5 * jnp.exp(-jnp.abs(z)) + 0.5)

    h = sp(x @ params["w1"] + params["b1"])
    h = sp(h @ params["w2"] + params["b2"])
    return h @ params["w3"] + params["b3"]


if __name__ == "__main__":
    key = jax.random.PRNGKey(0)
    kx, kp = jax.random.split(key)

    B, in_ftr, out_ftr = 512, 32, 4
    x = jax.random.normal(kx, (B, in_ftr), dtype=jnp.float32)
    params = init_params(kp, in_ftr, out_ftr)

    # B=512, pack=8 -> 64 packed rows, auto-split into a 2-tile "parallel" grid.
    fwd = jax.jit(functools.partial(out_forward, params=params))
    y = jax.block_until_ready(fwd(x))

    y_ref = reference_forward(x, params)
    assert y.shape == (B, out_ftr)
    assert jnp.allclose(y, y_ref, atol=2e-5, rtol=2e-5), float(jnp.max(jnp.abs(y - y_ref)))

    print("KERNEL_OK")
</pallas_src>

<mosaic_0001>
module attributes {stable_mosaic.version = 11 : i64} {
  func.func @kernel(%arg0: i32, %arg1: memref<32x256xf32, #tpu.memory_space<vmem>>, %arg2: memref<256x128xf32, #tpu.memory_space<vmem>>, %arg3: memref<1x128xf32, #tpu.memory_space<vmem>>, %arg4: memref<128x64xf32, #tpu.memory_space<vmem>>, %arg5: memref<1x64xf32, #tpu.memory_space<vmem>>, %arg6: memref<64x32xf32, #tpu.memory_space<vmem>>, %arg7: memref<1x32xf32, #tpu.memory_space<vmem>>, %arg8: memref<32x32xf32, #tpu.memory_space<vmem>>) attributes {dimension_semantics = [#tpu.dimension_semantics<parallel>], iteration_bounds = array<i64: 2>, scalar_prefetch = 0 : i64, scratch_operands = 0 : i64, tpu.core_type = #tpu.core_type<tc>, window_params = [{transform_indices = @transform_0, window_bounds = array<i64: 32, 256>}, {pipeline_mode = #tpu.pipeline_mode<synchronous>, transform_indices = @transform_1, window_bounds = array<i64: 256, 128>}, {pipeline_mode = #tpu.pipeline_mode<synchronous>, transform_indices = @transform_2, window_bounds = array<i64: 1, 128>}, {pipeline_mode = #tpu.pipeline_mode<synchronous>, transform_indices = @transform_3, window_bounds = array<i64: 128, 64>}, {pipeline_mode = #tpu.pipeline_mode<synchronous>, transform_indices = @transform_4, window_bounds = array<i64: 1, 64>}, {pipeline_mode = #tpu.pipeline_mode<synchronous>, transform_indices = @transform_5, window_bounds = array<i64: 64, 32>}, {pipeline_mode = #tpu.pipeline_mode<synchronous>, transform_indices = @transform_6, window_bounds = array<i64: 1, 32>}, {transform_indices = @transform_7, window_bounds = array<i64: 32, 32>}]} {
    %c0 = arith.constant 0 : index
    %c0_0 = arith.constant 0 : index
    %0 = vector.load %arg1[%c0, %c0_0] : memref<32x256xf32, #tpu.memory_space<vmem>>, vector<32x256xf32>
    %c0_1 = arith.constant 0 : index
    %c0_2 = arith.constant 0 : index
    %1 = vector.load %arg2[%c0_1, %c0_2] : memref<256x128xf32, #tpu.memory_space<vmem>>, vector<256x128xf32>
    %cst = arith.constant dense<0.000000e+00> : vector<32x128xf32>
    %2 = tpu.matmul %0, %1, %cst {dimension_numbers = #tpu.dot_dimension_numbers<[1], [0], [0], [1], [0, 0, 1, 1], [], []>} : vector<32x256xf32>, vector<256x128xf32>, vector<32x128xf32> -> vector<32x128xf32>
    %c0_3 = arith.constant 0 : index
    %c0_4 = arith.constant 0 : index
    %3 = vector.load %arg3[%c0_3, %c0_4] : memref<1x128xf32, #tpu.memory_space<vmem>>, vector<1x128xf32>
    %4 = vector.broadcast %3 : vector<1x128xf32> to vector<32x128xf32>
    %5 = arith.addf %2, %4 : vector<32x128xf32>
    %cst_5 = arith.constant 0.000000e+00 : f32
    %6 = vector.broadcast %cst_5 : f32 to vector<32x128xf32>
    %7 = arith.maximumf %5, %6 : vector<32x128xf32>
    %8 = math.absf %5 : vector<32x128xf32>
    %cst_6 = arith.constant 0.000000e+00 : f32
    %9 = vector.broadcast %cst_6 : f32 to vector<32x128xf32>
    %10 = arith.subf %9, %8 : vector<32x128xf32>
    %11 = math.exp %10 : vector<32x128xf32>
    %12 = math.log1p %11 : vector<32x128xf32>
    %13 = arith.addf %7, %12 : vector<32x128xf32>
    %c0_7 = arith.constant 0 : index
    %c0_8 = arith.constant 0 : index
    %14 = vector.load %arg4[%c0_7, %c0_8] : memref<128x64xf32, #tpu.memory_space<vmem>>, vector<128x64xf32>
    %cst_9 = arith.constant dense<0.000000e+00> : vector<32x64xf32>
    %15 = tpu.matmul %13, %14, %cst_9 {dimension_numbers = #tpu.dot_dimension_numbers<[1], [0], [0], [1], [0, 0, 1, 1], [], []>} : vector<32x128xf32>, vector<128x64xf32>, vector<32x64xf32> -> vector<32x64xf32>
    %c0_10 = arith.constant 0 : index
    %c0_11 = arith.constant 0 : index
    %16 = vector.load %arg5[%c0_10, %c0_11] : memref<1x64xf32, #tpu.memory_space<vmem>>, vector<1x64xf32>
    %17 = vector.broadcast %16 : vector<1x64xf32> to vector<32x64xf32>
    %18 = arith.addf %15, %17 : vector<32x64xf32>
    %cst_12 = arith.constant 0.000000e+00 : f32
    %19 = vector.broadcast %cst_12 : f32 to vector<32x64xf32>
    %20 = arith.maximumf %18, %19 : vector<32x64xf32>
    %21 = math.absf %18 : vector<32x64xf32>
    %cst_13 = arith.constant 0.000000e+00 : f32
    %22 = vector.broadcast %cst_13 : f32 to vector<32x64xf32>
    %23 = arith.subf %22, %21 : vector<32x64xf32>
    %24 = math.exp %23 : vector<32x64xf32>
    %25 = math.log1p %24 : vector<32x64xf32>
    %26 = arith.addf %20, %25 : vector<32x64xf32>
    %c0_14 = arith.constant 0 : index
    %c0_15 = arith.constant 0 : index
    %27 = vector.load %arg6[%c0_14, %c0_15] : memref<64x32xf32, #tpu.memory_space<vmem>>, vector<64x32xf32>
    %cst_16 = arith.constant dense<0.000000e+00> : vector<32x32xf32>
    %28 = tpu.matmul %26, %27, %cst_16 {dimension_numbers = #tpu.dot_dimension_numbers<[1], [0], [0], [1], [0, 0, 1, 1], [], []>} : vector<32x64xf32>, vector<64x32xf32>, vector<32x32xf32> -> vector<32x32xf32>
    %c0_17 = arith.constant 0 : index
    %c0_18 = arith.constant 0 : index
    %29 = vector.load %arg7[%c0_17, %c0_18] : memref<1x32xf32, #tpu.memory_space<vmem>>, vector<1x32xf32>
    %30 = vector.broadcast %29 : vector<1x32xf32> to vector<32x32xf32>
    %31 = arith.addf %28, %30 : vector<32x32xf32>
    %c0_19 = arith.constant 0 : index
    %c0_20 = arith.constant 0 : index
    %32 = vector.load %arg8[%c0_19, %c0_20] : memref<32x32xf32, #tpu.memory_space<vmem>>, vector<32x32xf32>
    tpu.vector_store %arg8[%c0_19, %c0_20], %31 {strides = array<i32>} : memref<32x32xf32, #tpu.memory_space<vmem>>, vector<32x32xf32>,
    return
  }
  func.func @transform_0(%arg0: i32) -> (i32, i32) {
    %c0_i32 = arith.constant 0 : i32
    %c0_i32_0 = arith.constant 0 : i32
    return %arg0, %c0_i32 : i32, i32
  }
  func.func @transform_1(%arg0: i32) -> (i32, i32) {
    %c0_i32 = arith.constant 0 : i32
    %c0_i32_0 = arith.constant 0 : i32
    %c0_i32_1 = arith.constant 0 : i32
    return %c0_i32, %c0_i32_0 : i32, i32
  }
  func.func @transform_2(%arg0: i32) -> (i32, i32) {
    %c0_i32 = arith.constant 0 : i32
    %c0_i32_0 = arith.constant 0 : i32
    %c0_i32_1 = arith.constant 0 : i32
    return %c0_i32, %c0_i32_0 : i32, i32
  }
  func.func @transform_3(%arg0: i32) -> (i32, i32) {
    %c0_i32 = arith.constant 0 : i32
    %c0_i32_0 = arith.constant 0 : i32
    %c0_i32_1 = arith.constant 0 : i32
    return %c0_i32, %c0_i32_0 : i32, i32
  }
  func.func @transform_4(%arg0: i32) -> (i32, i32) {
    %c0_i32 = arith.constant 0 : i32
    %c0_i32_0 = arith.constant 0 : i32
    %c0_i32_1 = arith.constant 0 : i32
    return %c0_i32, %c0_i32_0 : i32, i32
  }
  func.func @transform_5(%arg0: i32) -> (i32, i32) {
    %c0_i32 = arith.constant 0 : i32
    %c0_i32_0 = arith.constant 0 : i32
    %c0_i32_1 = arith.constant 0 : i32
    return %c0_i32, %c0_i32_0 : i32, i32
  }
  func.func @transform_6(%arg0: i32) -> (i32, i32) {
    %c0_i32 = arith.constant 0 : i32
    %c0_i32_0 = arith.constant 0 : i32
    %c0_i32_1 = arith.constant 0 : i32
    return %c0_i32, %c0_i32_0 : i32, i32
  }
  func.func @transform_7(%arg0: i32) -> (i32, i32) {
    %c0_i32 = arith.constant 0 : i32
    %c0_i32_0 = arith.constant 0 : i32
    return %arg0, %c0_i32 : i32, i32
  }
}

</mosaic_0001>

<llo_original>
// kernel: out_forward.1
$region0: #{out_forward.1}
  #allocation0 [shape = 'u32[]', space=smem, size = 0x4, offset = 0x4, fixed_abs, tag = 'smem constant byte address 0x4 - core index']
  #allocation1 [shape = 'u32[144,128]{1,0:T(1,128)}', space=vmem, size = 0x12000, scoped, tag = 'internal scratch']
  %s0 = inlined_call_operand.vmem [shape: f32[64,256], index: 0, kind: input, shape index: {}]
  %s1 = inlined_call_operand.vmem [shape: f32[256,128], index: 1, kind: input, shape index: {}]
  %s2 = inlined_call_operand.vmem [shape: f32[1,128], index: 2, kind: input, shape index: {}]
  %s3 = inlined_call_operand.vmem [shape: f32[128,64], index: 3, kind: input, shape index: {}]
  %s4 = inlined_call_operand.vmem [shape: f32[1,64], index: 4, kind: input, shape index: {}]
  %s5 = inlined_call_operand.vmem [shape: f32[64,32], index: 5, kind: input, shape index: {}]
  %s6 = inlined_call_operand.vmem [shape: f32[1,32], index: 6, kind: input, shape index: {}]
  %s7 = inlined_call_operand.vmem [shape: f32[64,32], index: 7, kind: output, shape index: {}]
  %s8 = sld [smem:[#allocation0]]
  $region61: #{out_forward.1} parent=0
    _
  %s10 = ssub.s32 1, %s8
  %s11 = scalar_select 0, %s10, %s8
  loop: start=0, step=1, limit=4
  $region2: #{out_forward.1} parent=0 // loop_pre_header
    _
  $region3: #{out_forward.1} parent=0 // loop_header
    %s13 = sphi 0, %s17
    %p14 = scmp.ge.s32.totalorder %s13, 4
    %s23 = sphi 0, %s25
    %s26 = sphi 0, %s23
    %s27 = sphi 0, %s26
    %s43 = sphi 0, %s27
    %s47 = sphi 0, %s47
    %s49 = sphi 0, %s47
    %s50 = sphi 0, %s49
    %s64 = sphi 0, %s50
    %s68 = sphi 0, %s68
    %s70 = sphi 0, %s68
    %s71 = sphi 0, %s70
    %s85 = sphi 0, %s71
    %s89 = sphi 0, %s89
    %s91 = sphi 0, %s89
    %s92 = sphi 0, %s91
    %s106 = sphi 0, %s92
    %s110 = sphi 0, %s110
    %s112 = sphi 0, %s110
    %s113 = sphi 0, %s112
    %s127 = sphi 0, %s113
    %s131 = sphi 0, %s131
    %s133 = sphi 0, %s131
    %s134 = sphi 0, %s133
    %s148 = sphi 0, %s134
    %s152 = sphi 0, %s152
    %s154 = sphi 0, %s152
    %s155 = sphi 0, %s154
    %s169 = sphi 0, %s155
    %s175 = sphi 0, %s177
    %s178 = sphi 0, %s175
    %s179 = sphi 0, %s178
    %s195 = sphi 0, %s179
  $region4: #{out_forward.1} parent=0 // loop_header_branch
    %16 = sbr.rel (%p14) target = $region8
  $region5: #{out_forward.1} parent=0 // loop_body
    %s18 = ssub.s32 %s13, 1
    %s19 = ssub.s32 %s13, 2
    %s20 = sadd.s32 %s13, 1
    %s21 = ssub.s32 %s13, %s20
    %p22 = scmp.eq.s32.totalorder %s21, 0
    %s24 = sadd.s32 %s23, 1
    %s25 = scalar_select %p22, %s23, %s24
    %p28 = pneg %p22
    %p29 = scmp.eq.s32.totalorder %s13, 1
    %p30 = por %p28, %p29
    %p31 = scmp.ne.s32.totalorder %s23, %s26
    %p32 = scmp.eq.s32.totalorder %s13, 0
    %p33 = por %p31, %p32
    %p34 = scmp.ne.s32.totalorder %s23, %s26
    %p35 = scmp.eq.s32.totalorder %s18, 1
    %p36 = por %p34, %p35
    %p37 = scmp.ne.s32.totalorder %s26, %s27
    %p38 = scmp.eq.s32.totalorder %s18, 0
    %p39 = por %p37, %p38
    %p40 = scmp.ne.s32.totalorder %s26, %s27
    %p41 = scmp.eq.s32.totalorder %s19, 1
    %p42 = por %p40, %p41
    %p44 = scmp.ne.s32.totalorder %s27, %s43
    %p45 = scmp.eq.s32.totalorder %s19, 0
    %p46 = por %p44, %p45
    %s48 = sadd.s32 %s47, 1
    %p51 = scmp.eq.s32.totalorder %s13, 1
    %p52 = scmp.ne.s32.totalorder %s47, %s49
    %p53 = scmp.eq.s32.totalorder %s13, 0
    %p54 = por %p52, %p53
    %p55 = scmp.ne.s32.totalorder %s47, %s49
    %p56 = scmp.eq.s32.totalorder %s18, 1
    %p57 = por %p55, %p56
    %p58 = scmp.ne.s32.totalorder %s49, %s50
    %p59 = scmp.eq.s32.totalorder %s18, 0
    %p60 = por %p58, %p59
    %p61 = scmp.ne.s32.totalorder %s49, %s50
    %p62 = scmp.eq.s32.totalorder %s19, 1
    %p63 = por %p61, %p62
    %p65 = scmp.ne.s32.totalorder %s50, %s64
    %p66 = scmp.eq.s32.totalorder %s19, 0
    %p67 = por %p65, %p66
    %s69 = sadd.s32 %s68, 1
    %p72 = scmp.eq.s32.totalorder %s13, 1
    %p73 = scmp.ne.s32.totalorder %s68, %s70
    %p74 = scmp.eq.s32.totalorder %s13, 0
    %p75 = por %p73, %p74
    %p76 = scmp.ne.s32.totalorder %s68, %s70
    %p77 = scmp.eq.s32.totalorder %s18, 1
    %p78 = por %p76, %p77
    %p79 = scmp.ne.s32.totalorder %s70, %s71
    %p80 = scmp.eq.s32.totalorder %s18, 0
    %p81 = por %p79, %p80
    %p82 = scmp.ne.s32.totalorder %s70, %s71
    %p83 = scmp.eq.s32.totalorder %s19, 1
    %p84 = por %p82, %p83
    %p86 = scmp.ne.s32.totalorder %s71, %s85
    %p87 = scmp.eq.s32.totalorder %s19, 0
    %p88 = por %p86, %p87
    %s90 = sadd.s32 %s89, 1
    %p93 = scmp.eq.s32.totalorder %s13, 1
    %p94 = scmp.ne.s32.totalorder %s89, %s91
    %p95 = scmp.eq.s32.totalorder %s13, 0
    %p96 = por %p94, %p95
    %p97 = scmp.ne.s32.totalorder %s89, %s91
    %p98 = scmp.eq.s32.totalorder %s18, 1
    %p99 = por %p97, %p98
    %p100 = scmp.ne.s32.totalorder %s91, %s92
    %p101 = scmp.eq.s32.totalorder %s18, 0
    %p102 = por %p100, %p101
    %p103 = scmp.ne.s32.totalorder %s91, %s92
    %p104 = scmp.eq.s32.totalorder %s19, 1
    %p105 = por %p103, %p104
    %p107 = scmp.ne.s32.totalorder %s92, %s106
    %p108 = scmp.eq.s32.totalorder %s19, 0
    %p109 = por %p107, %p108
    %s111 = sadd.s32 %s110, 1
    %p114 = scmp.eq.s32.totalorder %s13, 1
    %p115 = scmp.ne.s32.totalorder %s110, %s112
    %p116 = scmp.eq.s32.totalorder %s13, 0
    %p117 = por %p115, %p116
    %p118 = scmp.ne.s32.totalorder %s110, %s112
    %p119 = scmp.eq.s32.totalorder %s18, 1
    %p120 = por %p118, %p119
    %p121 = scmp.ne.s32.totalorder %s112, %s113
    %p122 = scmp.eq.s32.totalorder %s18, 0
    %p123 = por %p121, %p122
    %p124 = scmp.ne.s32.totalorder %s112, %s113
    %p125 = scmp.eq.s32.totalorder %s19, 1
    %p126 = por %p124, %p125
    %p128 = scmp.ne.s32.totalorder %s113, %s127
    %p129 = scmp.eq.s32.totalorder %s19, 0
    %p130 = por %p128, %p129
    %s132 = sadd.s32 %s131, 1
    %p135 = scmp.eq.s32.totalorder %s13, 1
    %p136 = scmp.ne.s32.totalorder %s131, %s133
    %p137 = scmp.eq.s32.totalorder %s13, 0
    %p138 = por %p136, %p137
    %p139 = scmp.ne.s32.totalorder %s131, %s133
    %p140 = scmp.eq.s32.totalorder %s18, 1
    %p141 = por %p139, %p140
    %p142 = scmp.ne.s32.totalorder %s133, %s134
    %p143 = scmp.eq.s32.totalorder %s18, 0
    %p144 = por %p142, %p143
    %p145 = scmp.ne.s32.totalorder %s133, %s134
    %p146 = scmp.eq.s32.totalorder %s19, 1
    %p147 = por %p145, %p146
    %p149 = scmp.ne.s32.totalorder %s134, %s148
    %p150 = scmp.eq.s32.totalorder %s19, 0
    %p151 = por %p149, %p150
    %s153 = sadd.s32 %s152, 1
    %p156 = scmp.eq.s32.totalorder %s13, 1
    %p157 = scmp.ne.s32.totalorder %s152, %s154
    %p158 = scmp.eq.s32.totalorder %s13, 0
    %p159 = por %p157, %p158
    %p160 = scmp.ne.s32.totalorder %s152, %s154
    %p161 = scmp.eq.s32.totalorder %s18, 1
    %p162 = por %p160, %p161
    %p163 = scmp.ne.s32.totalorder %s154, %s155
    %p164 = scmp.eq.s32.totalorder %s18, 0
    %p165 = por %p163, %p164
    %p166 = scmp.ne.s32.totalorder %s154, %s155
    %p167 = scmp.eq.s32.totalorder %s19, 1
    %p168 = por %p166, %p167
    %p170 = scmp.ne.s32.totalorder %s155, %s169
    %p171 = scmp.eq.s32.totalorder %s19, 0
    %p172 = por %p170, %p171
    %s173 = ssub.s32 %s13, %s20
    %p174 = scmp.eq.s32.totalorder %s173, 0
    %s176 = sadd.s32 %s175, 1
    %s177 = scalar_select %p174, %s175, %s176
    %p180 = pneg %p174
    %p181 = scmp.eq.s32.totalorder %s13, 1
    %p182 = por %p180, %p181
    %p183 = scmp.ne.s32.totalorder %s175, %s178
    %p184 = scmp.eq.s32.totalorder %s13, 0
    %p185 = por %p183, %p184
    %p186 = scmp.ne.s32.totalorder %s175, %s178
    %p187 = scmp.eq.s32.totalorder %s18, 1
    %p188 = por %p186, %p187
    %p189 = scmp.ne.s32.totalorder %s178, %s179
    %p190 = scmp.eq.s32.totalorder %s18, 0
    %p191 = por %p189, %p190
    %p192 = scmp.ne.s32.totalorder %s178, %s179
    %p193 = scmp.eq.s32.totalorder %s19, 1
    %p194 = por %p192, %p193
    %p196 = scmp.ne.s32.totalorder %s179, %s195
    %p197 = scmp.eq.s32.totalorder %s19, 0
    %p198 = por %p196, %p197
    %p199 = scmp.le.s32.totalorder 1, %s13
    %p200 = scmp.lt.s32.totalorder %s13, 3
    %p201 = pnand %p199, %p200
    %p202 = pneg %p201
    // Predicated region
    $region9: #{out_forward.1} parent=5 // pred_check
      _
    $region10: #{out_forward.1} parent=5 // pred_check_branch
      %204 = sbr.rel (%p201) target = $region12
    $region11: #{out_forward.1} parent=5 // pred_region
      %s205 = ssub.s32 %s13, 1
      // Predicated region
      $region13: #{out_forward.1} parent=11 // pred_check
        %p206 = pneg %p60
      $region14: #{out_forward.1} parent=11 // pred_check_branch
        %208 = sbr.rel (%p206) target = $region16
      $region15: #{out_forward.1} parent=11 // pred_region
        _
      $region16: #{out_forward.1} parent=11 // pred_fallthru
        _
      // Predicated region
      $region17: #{out_forward.1} parent=11 // pred_check
        %p209 = pneg %p81
      $region18: #{out_forward.1} parent=11 // pred_check_branch
        %211 = sbr.rel (%p209) target = $region20
      $region19: #{out_forward.1} parent=11 // pred_region
        _
      $region20: #{out_forward.1} parent=11 // pred_fallthru
        _
      // Predicated region
      $region21: #{out_forward.1} parent=11 // pred_check
        %p212 = pneg %p102
      $region22: #{out_forward.1} parent=11 // pred_check_branch
        %214 = sbr.rel (%p212) target = $region24
      $region23: #{out_forward.1} parent=11 // pred_region
        _
      $region24: #{out_forward.1} parent=11 // pred_fallthru
        _
      // Predicated region
      $region25: #{out_forward.1} parent=11 // pred_check
        %p215 = pneg %p123
      $region26: #{out_forward.1} parent=11 // pred_check_branch
        %217 = sbr.rel (%p215) target = $region28
      $region27: #{out_forward.1} parent=11 // pred_region
        _
      $region28: #{out_forward.1} parent=11 // pred_fallthru
        _
      // Predicated region
      $region29: #{out_forward.1} parent=11 // pred_check
        %p218 = pneg %p144
      $region30: #{out_forward.1} parent=11 // pred_check_branch
        %220 = sbr.rel (%p218) target = $region32
      $region31: #{out_forward.1} parent=11 // pred_region
        _
      $region32: #{out_forward.1} parent=11 // pred_fallthru
        _
      // Predicated region
      $region33: #{out_forward.1} parent=11 // pred_check
        %p221 = pneg %p165
      $region34: #{out_forward.1} parent=11 // pred_check_branch
        %223 = sbr.rel (%p221) target = $region36
      $region35: #{out_forward.1} parent=11 // pred_region
        _
      $region36: #{out_forward.1} parent=11 // pred_fallthru
        _
    $region12: #{out_forward.1} parent=5 // pred_fallthru
      _
    %p224 = scmp.lt.s32.totalorder %s13, 2
    // Predicated region
    $region37: #{out_forward.1} parent=5 // pred_check
      %p225 = pneg %p224
    $region38: #{out_forward.1} parent=5 // pred_check_branch
      %227 = sbr.rel (%p225) target = $region40
    $region39: #{out_forward.1} parent=5 // pred_region
      // Predicated region
      $region41: #{out_forward.1} parent=39 // pred_check
        %p228 = pneg %p33
      $region42: #{out_forward.1} parent=39 // pred_check_branch
        %230 = sbr.rel (%p228) target = $region44
      $region43: #{out_forward.1} parent=39 // pred_region
        %s231 = smul.u32 4, %s13
        %p232 = scmp.lt.s32.totalorder %s231, 7
        %s233 = scalar_select %p232, %s231, 7
        %s234 = smul.addr %s233, 2
        %s235 = smul.addr %s234, 8
        %s236 = scalar_lea.vmem %s0, %s235
        %s237 = smul.u32 4, %s13
      $region44: #{out_forward.1} parent=39 // pred_fallthru
        _
    $region40: #{out_forward.1} parent=5 // pred_fallthru
      _
    %p238 = scmp.le.s32.totalorder 1, %s13
    %p239 = scmp.lt.s32.totalorder %s13, 3
    %p240 = pnand %p238, %p239
    %p241 = pneg %p240
    // Predicated region
    $region45: #{out_forward.1} parent=5 // pred_check
      _
    $region46: #{out_forward.1} parent=5 // pred_check_branch
      %243 = sbr.rel (%p240) target = $region48
    $region47: #{out_forward.1} parent=5 // pred_region
      %s244 = ssub.s32 %s13, 1
      %s245 = smul.u32 4, %s18
      %p246 = scmp.lt.s32.totalorder %s245, 7
      %s247 = scalar_select %p246, %s245, 7
      %s248 = smul.addr %s247, 2
      %s249 = smul.addr %s248, 8
      %s250 = scalar_lea.vmem %s0, %s249
      %p251 = pneg %p39
      %p252 = pneg %p36
      %p253 = pneg %p60
      %p254 = pneg %p57
      %p255 = pneg %p81
      %p256 = pneg %p78
      %p257 = pneg %p102
      %p258 = pneg %p99
      %p259 = pneg %p123
      %p260 = pneg %p120
      %p261 = pneg %p144
      %p262 = pneg %p141
      %p263 = pneg %p165
      %p264 = pneg %p162
      %p265 = pneg %p191
      %p266 = pneg %p188
      %s267 = smul.u32 4, %s18
      %p268 = scmp.lt.s32.totalorder %s267, 7
      %s269 = scalar_select %p268, %s267, 7
      %s270 = smul.addr %s269, 8
      %s271 = scalar_lea.vmem %s7, %s270
      %s272 = smul.u32 4, %s18
      %p273 = scmp.lt.s32.totalorder %s272, 7
      %s274 = scalar_select %p273, %s272, 7
      %s275 = smul.addr %s274, 2
      %s276 = smul.addr %s275, 8
      %s277 = scalar_lea.vmem %s0, %s276
      %s278 = smul.u32 4, %s18
      %s279 = smul.u32 4, %s18
      %p280 = scmp.lt.s32.totalorder %s279, 7
      %s281 = scalar_select %p280, %s279, 7
      %s282 = smul.addr %s281, 8
      %s283 = scalar_lea.vmem %s7, %s282
      %s284 = smul.u32 4, %s18
      %v285 = vld [vmem:[%s277] sm:$0xff]
      %v286 = vld [vmem:[%s277 + $0x8] sm:$0xff]
      %v287 = vld [vmem:[%s277 + $0x10] sm:$0xff]
      %v288 = vld [vmem:[%s277 + $0x18] sm:$0xff]
      %v289 = vld [vmem:[%s277 + $0x20] sm:$0xff]
      %v290 = vld [vmem:[%s277 + $0x28] sm:$0xff]
      %v291 = vld [vmem:[%s277 + $0x30] sm:$0xff]
      %v292 = vld [vmem:[%s277 + $0x38] sm:$0xff]
      %v293 = vld [vmem:[%s1] sm:$0xff]
      %v294 = vld [vmem:[%s1 + $0x8] sm:$0xff]
      %v295 = vld [vmem:[%s1 + $0x10] sm:$0xff]
      %v296 = vld [vmem:[%s1 + $0x18] sm:$0xff]
      %v297 = vld [vmem:[%s1 + $0x20] sm:$0xff]
      %v298 = vld [vmem:[%s1 + $0x28] sm:$0xff]
      %v299 = vld [vmem:[%s1 + $0x30] sm:$0xff]
      %v300 = vld [vmem:[%s1 + $0x38] sm:$0xff]
      %v301 = vld [vmem:[%s1 + $0x40] sm:$0xff]
      %v302 = vld [vmem:[%s1 + $0x48] sm:$0xff]
      %v303 = vld [vmem:[%s1 + $0x50] sm:$0xff]
      %v304 = vld [vmem:[%s1 + $0x58] sm:$0xff]
      %v305 = vld [vmem:[%s1 + $0x60] sm:$0xff]
      %v306 = vld [vmem:[%s1 + $0x68] sm:$0xff]
      %v307 = vld [vmem:[%s1 + $0x70] sm:$0xff]
      %v308 = vld [vmem:[%s1 + $0x78] sm:$0xff]
      %v309 = vld [vmem:[%s1 + $0x80] sm:$0xff]
      %v310 = vld [vmem:[%s1 + $0x88] sm:$0xff]
      %v311 = vld [vmem:[%s1 + $0x90] sm:$0xff]
      %v312 = vld [vmem:[%s1 + $0x98] sm:$0xff]
      %v313 = vld [vmem:[%s1 + $0xa0] sm:$0xff]
      %v314 = vld [vmem:[%s1 + $0xa8] sm:$0xff]
      %v315 = vld [vmem:[%s1 + $0xb0] sm:$0xff]
      %v316 = vld [vmem:[%s1 + $0xb8] sm:$0xff]
      %v317 = vld [vmem:[%s1 + $0xc0] sm:$0xff]
      %v318 = vld [vmem:[%s1 + $0xc8] sm:$0xff]
      %v319 = vld [vmem:[%s1 + $0xd0] sm:$0xff]
      %v320 = vld [vmem:[%s1 + $0xd8] sm:$0xff]
      %v321 = vld [vmem:[%s1 + $0xe0] sm:$0xff]
      %v322 = vld [vmem:[%s1 + $0xe8] sm:$0xff]
      %v323 = vld [vmem:[%s1 + $0xf0] sm:$0xff]
      %v324 = vld [vmem:[%s1 + $0xf8] sm:$0xff]
      %v325 = vld [vmem:[%s2] sm:$0x1]
      %v327 = vlaneseq
      %v328 = vshrl.u32 %v327, 7
      %v329 = vsub.s32 0, %v328
      %v330 = vrot.slane %v325, %v329
      %332 = vmatprep.subr.mxu0 0.0
      %333 = vmatpush1.msra.mxu0 %v308
      %334 = vmatprep.subr.mxu0 0.0
      %335 = vmatpush1.msra.mxu0 %v307
      %336 = vmatprep.subr.mxu0 0.0
      %337 = vmatpush1.msra.mxu0 %v306
      %338 = vmatprep.subr.mxu0 0.0
      %339 = vmatpush1.msra.mxu0 %v305
      %340 = vmatprep.subr.mxu0 0.0
      %341 = vmatpush1.msra.mxu0 %v304
      %342 = vmatprep.subr.mxu0 0.0
      %343 = vmatpush1.msra.mxu0 %v303
      %344 = vmatprep.subr.mxu0 0.0
      %345 = vmatpush1.msra.mxu0 %v302
      %346 = vmatprep.subr.mxu0 0.0
      %347 = vmatpush1.msra.mxu0 %v301
      %348 = vmatprep.subr.mxu0 0.0
      %349 = vmatpush1.msra.mxu0 %v300
      %350 = vmatprep.subr.mxu0 0.0
      %351 = vmatpush1.msra.mxu0 %v299
      %352 = vmatprep.subr.mxu0 0.0
      %353 = vmatpush1.msra.mxu0 %v298
      %354 = vmatprep.subr.mxu0 0.0
      %355 = vmatpush1.msra.mxu0 %v297
      %356 = vmatprep.subr.mxu0 0.0
      %357 = vmatpush1.msra.mxu0 %v296
      %358 = vmatprep.subr.mxu0 0.0
      %359 = vmatpush1.msra.mxu0 %v295
      %360 = vmatprep.subr.mxu0 0.0
      %361 = vmatpush1.msra.mxu0 %v294
      %362 = vmatprep.subr.mxu0 0.0
      %363 = vmatpush1.msra.mxu0 %v293
      %364 = vmatprep.subr.mxu0 0.0
      %365 = vmatpush2.msra.mxu0 %v324
      %366 = vmatprep.subr.mxu0 0.0
      %367 = vmatpush2.msra.mxu0 %v323
      %368 = vmatprep.subr.mxu0 0.0
      %369 = vmatpush2.msra.mxu0 %v322
      %370 = vmatprep.subr.mxu0 0.0
      %371 = vmatpush2.msra.mxu0 %v321
      %372 = vmatprep.subr.mxu0 0.0
      %373 = vmatpush2.msra.mxu0 %v320
      %374 = vmatprep.subr.mxu0 0.0
      %375 = vmatpush2.msra.mxu0 %v319
      %376 = vmatprep.subr.mxu0 0.0
      %377 = vmatpush2.msra.mxu0 %v318
      %378 = vmatprep.subr.mxu0 0.0
      %379 = vmatpush2.msra.mxu0 %v317
      %380 = vmatprep.subr.mxu0 0.0
      %381 = vmatpush2.msra.mxu0 %v316
      %382 = vmatprep.subr.mxu0 0.0
      %383 = vmatpush2.msra.mxu0 %v315
      %384 = vmatprep.subr.mxu0 0.0
      %385 = vmatpush2.msra.mxu0 %v314
      %386 = vmatprep.subr.mxu0 0.0
      %387 = vmatpush2.msra.mxu0 %v313
      %388 = vmatprep.subr.mxu0 0.0
      %389 = vmatpush2.msra.mxu0 %v312
      %390 = vmatprep.subr.mxu0 0.0
      %391 = vmatpush2.msra.mxu0 %v311
      %392 = vmatprep.subr.mxu0 0.0
      %393 = vmatpush2.msra.mxu0 %v310
      %394 = vmatprep.subr.mxu0 0.0
      %395 = vmatpush2.msra.mxu0 %v309
      %396 = vmatprep.mubr.f32.mxu0 %v286
      %397 = vmatmul.mubr.f32.gmra.mxu0 %v285
      %v398 = vpop.f32.mrf.mxu0
      %v399 = vadd.f32 %v330, %v398
      %v400 = vpop.f32.mrf.mxu0
      %401 = vmatprep.mubr.f32.mxu0 %v288
      %402 = vmatmul.mubr.f32.gmra.mxu0 %v287
      %v403 = vpop.f32.mrf.mxu0
      %v404 = vadd.f32 %v330, %v403
      %v405 = vpop.f32.mrf.mxu0
      %406 = vmatprep.mubr.f32.mxu0 %v290
      %407 = vmatmul.mubr.f32.gmra.mxu0 %v289
      %v408 = vpop.f32.mrf.mxu0
      %v409 = vadd.f32 %v330, %v408
      %v410 = vpop.f32.mrf.mxu0
      %411 = vmatprep.mubr.f32.mxu0 %v292
      %412 = vmatmul.mubr.f32.gmra.mxu0 %v291
      %v413 = vpop.f32.mrf.mxu0
      %v414 = vadd.f32 %v330, %v413
      %v415 = vpop.f32.mrf.mxu0
      %416 = vdwg.mxu0
      %v417 = vmax.f32 %v399, 0.0
      %v418 = vmax.f32 %v404, 0.0
      %v419 = vmax.f32 %v409, 0.0
      %v420 = vmax.f32 %v414, 0.0
      %v421 = vand.u32 2147483647, %v399
      %v422 = vand.u32 2147483647, %v404
      %v423 = vand.u32 2147483647, %v409
      %v424 = vand.u32 2147483647, %v414
      %v425 = vsub.f32 0.0, %v421
      %v426 = vsub.f32 0.0, %v422
      %v427 = vsub.f32 0.0, %v423
      %v428 = vsub.f32 0.0, %v424
      %v429 = vmul.f32 %v425, 1.442695
      %v430 = vpow.pop %v429
      %v431 = vmul.f32 %v426, 1.442695
      %v432 = vpow.pop %v431
      %v433 = vmul.f32 %v427, 1.442695
      %v434 = vpow.pop %v433
      %v435 = vmul.f32 %v428, 1.442695
      %v436 = vpow.pop %v435
      %v437 = vadd.f32 %v430, 1.0
      %v438 = vlog2.pop %v437
      %v439 = vmul.f32 %v438, 0.6931472
      %v440 = vmul.f32 -0.5, %v430
      %v441 = vadd.f32 %v440, 1.0
      %v442 = vmul.f32 %v441, %v430
      %v443 = vand.u32 2147483647, %v430
      %vm444 = vcmp.lt.f32.partialorder %v443, 0.0004427343
      %v445 = vsel %vm444, %v442, %v439
      %v446 = vadd.f32 %v432, 1.0
      %v447 = vlog2.pop %v446
      %v448 = vmul.f32 %v447, 0.6931472
      %v449 = vmul.f32 -0.5, %v432
      %v450 = vadd.f32 %v449, 1.0
      %v451 = vmul.f32 %v450, %v432
      %v452 = vand.u32 2147483647, %v432
      %vm453 = vcmp.lt.f32.partialorder %v452, 0.0004427343
      %v454 = vsel %vm453, %v451, %v448
      %v455 = vadd.f32 %v434, 1.0
      %v456 = vlog2.pop %v455
      %v457 = vmul.f32 %v456, 0.6931472
      %v458 = vmul.f32 -0.5, %v434
      %v459 = vadd.f32 %v458, 1.0
      %v460 = vmul.f32 %v459, %v434
      %v461 = vand.u32 2147483647, %v434
      %vm462 = vcmp.lt.f32.partialorder %v461, 0.0004427343
      %v463 = vsel %vm462, %v460, %v457
      %v464 = vadd.f32 %v436, 1.0
      %v465 = vlog2.pop %v464
      %v466 = vmul.f32 %v465, 0.6931472
      %v467 = vmul.f32 -0.5, %v436
      %v468 = vadd.f32 %v467, 1.0
      %v469 = vmul.f32 %v468, %v436
      %v470 = vand.u32 2147483647, %v436
      %vm471 = vcmp.lt.f32.partialorder %v470, 0.0004427343
      %v472 = vsel %vm471, %v469, %v466
      %v473 = vadd.f32 %v417, %v445
      %v474 = vadd.f32 %v418, %v454
      %v475 = vadd.f32 %v419, %v463
      %v476 = vadd.f32 %v420, %v472
      %v477 = vld [vmem:[%s3] sm:$0xff]
      %v478 = vld [vmem:[%s3 + $0x8] sm:$0xff]
      %v479 = vld [vmem:[%s3 + $0x10] sm:$0xff]
      %v480 = vld [vmem:[%s3 + $0x18] sm:$0xff]
      %v481 = vld [vmem:[%s3 + $0x20] sm:$0xff]
      %v482 = vld [vmem:[%s3 + $0x28] sm:$0xff]
      %v483 = vld [vmem:[%s3 + $0x30] sm:$0xff]
      %v484 = vld [vmem:[%s3 + $0x38] sm:$0xff]
      %v485 = vld [vmem:[%s3 + $0x40] sm:$0xff]
      %v486 = vld [vmem:[%s3 + $0x48] sm:$0xff]
      %v487 = vld [vmem:[%s3 + $0x50] sm:$0xff]
      %v488 = vld [vmem:[%s3 + $0x58] sm:$0xff]
      %v489 = vld [vmem:[%s3 + $0x60] sm:$0xff]
      %v490 = vld [vmem:[%s3 + $0x68] sm:$0xff]
      %v491 = vld [vmem:[%s3 + $0x70] sm:$0xff]
      %v492 = vld [vmem:[%s3 + $0x78] sm:$0xff]
      %v493 = vld [vmem:[%s4] sm:$0x1]
      %v495 = vlaneseq
      %v496 = vshrl.u32 %v495, 7
      %v497 = vsub.s32 0, %v496
      %v498 = vrot.slane %v493, %v497
      %500 = vmatprep.subr.mxu0 0.0
      %501 = vmatpush1.msra.mxu0 %v492
      %502 = vmatprep.subr.mxu0 0.0
      %503 = vmatpush1.msra.mxu0 %v491
      %504 = vmatprep.subr.mxu0 0.0
      %505 = vmatpush1.msra.mxu0 %v490
      %506 = vmatprep.subr.mxu0 0.0
      %507 = vmatpush1.msra.mxu0 %v489
      %508 = vmatprep.subr.mxu0 0.0
      %509 = vmatpush1.msra.mxu0 %v488
      %510 = vmatprep.subr.mxu0 0.0
      %511 = vmatpush1.msra.mxu0 %v487
      %512 = vmatprep.subr.mxu0 0.0
      %513 = vmatpush1.msra.mxu0 %v486
      %514 = vmatprep.subr.mxu0 0.0
      %515 = vmatpush1.msra.mxu0 %v485
      %516 = vmatprep.subr.mxu0 0.0
      %517 = vmatpush1.msra.mxu0 %v484
      %518 = vmatprep.subr.mxu0 0.0
      %519 = vmatpush1.msra.mxu0 %v483
      %520 = vmatprep.subr.mxu0 0.0
      %521 = vmatpush1.msra.mxu0 %v482
      %522 = vmatprep.subr.mxu0 0.0
      %523 = vmatpush1.msra.mxu0 %v481
      %524 = vmatprep.subr.mxu0 0.0
      %525 = vmatpush1.msra.mxu0 %v480
      %526 = vmatprep.subr.mxu0 0.0
      %527 = vmatpush1.msra.mxu0 %v479
      %528 = vmatprep.subr.mxu0 0.0
      %529 = vmatpush1.msra.mxu0 %v478
      %530 = vmatprep.subr.mxu0 0.0
      %531 = vmatpush1.msra.mxu0 %v477
      %532 = vmatprep.subr.mxu0 0.0
      %533 = vmatpush2.msra.mxu0 0.0
      %534 = vmatprep.subr.mxu0 0.0
      %535 = vmatpush2.msra.mxu0 0.0
      %536 = vmatprep.subr.mxu0 0.0
      %537 = vmatpush2.msra.mxu0 0.0
      %538 = vmatprep.subr.mxu0 0.0
      %539 = vmatpush2.msra.mxu0 0.0
      %540 = vmatprep.subr.mxu0 0.0
      %541 = vmatpush2.msra.mxu0 0.0
      %542 = vmatprep.subr.mxu0 0.0
      %543 = vmatpush2.msra.mxu0 0.0
      %544 = vmatprep.subr.mxu0 0.0
      %545 = vmatpush2.msra.mxu0 0.0
      %546 = vmatprep.subr.mxu0 0.0
      %547 = vmatpush2.msra.mxu0 0.0
      %548 = vmatprep.subr.mxu0 0.0
      %549 = vmatpush2.msra.mxu0 0.0
      %550 = vmatprep.subr.mxu0 0.0
      %551 = vmatpush2.msra.mxu0 0.0
      %552 = vmatprep.subr.mxu0 0.0
      %553 = vmatpush2.msra.mxu0 0.0
      %554 = vmatprep.subr.mxu0 0.0
      %555 = vmatpush2.msra.mxu0 0.0
      %556 = vmatprep.subr.mxu0 0.0
      %557 = vmatpush2.msra.mxu0 0.0
      %558 = vmatprep.subr.mxu0 0.0
      %559 = vmatpush2.msra.mxu0 0.0
      %560 = vmatprep.subr.mxu0 0.0
      %561 = vmatpush2.msra.mxu0 0.0
      %562 = vmatprep.subr.mxu0 0.0
      %563 = vmatpush2.msra.mxu0 0.0
      %564 = vmatprep.mubr.f32.mxu0 0.0
      %565 = vmatmul.mubr.f32.gmra.mxu0 %v473
      %v566 = vpop.f32.mrf.mxu0
      %v567 = vadd.f32 %v498, %v566
      %v568 = vpop.f32.mrf.mxu0
      %569 = vmatprep.mubr.f32.mxu0 0.0
      %570 = vmatmul.mubr.f32.gmra.mxu0 %v474
      %v571 = vpop.f32.mrf.mxu0
      %v572 = vadd.f32 %v498, %v571
      %v573 = vpop.f32.mrf.mxu0
      %574 = vmatprep.mubr.f32.mxu0 0.0
      %575 = vmatmul.mubr.f32.gmra.mxu0 %v475
      %v576 = vpop.f32.mrf.mxu0
      %v577 = vadd.f32 %v498, %v576
      %v578 = vpop.f32.mrf.mxu0
      %579 = vmatprep.mubr.f32.mxu0 0.0
      %580 = vmatmul.mubr.f32.gmra.mxu0 %v476
      %v581 = vpop.f32.mrf.mxu0
      %v582 = vadd.f32 %v498, %v581
      %v583 = vpop.f32.mrf.mxu0
      %584 = vdwg.mxu0
      %v585 = vmax.f32 %v567, 0.0
      %v586 = vmax.f32 %v572, 0.0
      %v587 = vmax.f32 %v577, 0.0
      %v588 = vmax.f32 %v582, 0.0
      %v589 = vand.u32 2147483647, %v567
      %v590 = vand.u32 2147483647, %v572
      %v591 = vand.u32 2147483647, %v577
      %v592 = vand.u32 2147483647, %v582
      %v593 = vsub.f32 0.0, %v589
      %v594 = vsub.f32 0.0, %v590
      %v595 = vsub.f32 0.0, %v591
      %v596 = vsub.f32 0.0, %v592
      %v597 = vmul.f32 %v593, 1.442695
      %v598 = vpow.pop %v597
      %v599 = vmul.f32 %v594, 1.442695
      %v600 = vpow.pop %v599
      %v601 = vmul.f32 %v595, 1.442695
      %v602 = vpow.pop %v601
      %v603 = vmul.f32 %v596, 1.442695
      %v604 = vpow.pop %v603
      %v605 = vadd.f32 %v598, 1.0
      %v606 = vlog2.pop %v605
      %v607 = vmul.f32 %v606, 0.6931472
      %v608 = vmul.f32 -0.5, %v598
      %v609 = vadd.f32 %v608, 1.0
      %v610 = vmul.f32 %v609, %v598
      %v611 = vand.u32 2147483647, %v598
      %vm612 = vcmp.lt.f32.partialorder %v611, 0.0004427343
      %v613 = vsel %vm612, %v610, %v607
      %v614 = vadd.f32 %v600, 1.0
      %v615 = vlog2.pop %v614
      %v616 = vmul.f32 %v615, 0.6931472
      %v617 = vmul.f32 -0.5, %v600
      %v618 = vadd.f32 %v617, 1.0
      %v619 = vmul.f32 %v618, %v600
      %v620 = vand.u32 2147483647, %v600
      %vm621 = vcmp.lt.f32.partialorder %v620, 0.0004427343
      %v622 = vsel %vm621, %v619, %v616
      %v623 = vadd.f32 %v602, 1.0
      %v624 = vlog2.pop %v623
      %v625 = vmul.f32 %v624, 0.6931472
      %v626 = vmul.f32 -0.5, %v602
      %v627 = vadd.f32 %v626, 1.0
      %v628 = vmul.f32 %v627, %v602
      %v629 = vand.u32 2147483647, %v602
      %vm630 = vcmp.lt.f32.partialorder %v629, 0.0004427343
      %v631 = vsel %vm630, %v628, %v625
      %v632 = vadd.f32 %v604, 1.0
      %v633 = vlog2.pop %v632
      %v634 = vmul.f32 %v633, 0.6931472
      %v635 = vmul.f32 -0.5, %v604
      %v636 = vadd.f32 %v635, 1.0
      %v637 = vmul.f32 %v636, %v604
      %v638 = vand.u32 2147483647, %v604
      %vm639 = vcmp.lt.f32.partialorder %v638, 0.0004427343
      %v640 = vsel %vm639, %v637, %v634
      %v641 = vadd.f32 %v585, %v613
      %v642 = vadd.f32 %v586, %v622
      %v643 = vadd.f32 %v587, %v631
      %v644 = vadd.f32 %v588, %v640
      %v645 = vld [vmem:[%s5] sm:$0xff]
      %v646 = vld [vmem:[%s5 + $0x8] sm:$0xff]
      %v647 = vld [vmem:[%s5 + $0x10] sm:$0xff]
      %v648 = vld [vmem:[%s5 + $0x18] sm:$0xff]
      %v649 = vld [vmem:[%s5 + $0x20] sm:$0xff]
      %v650 = vld [vmem:[%s5 + $0x28] sm:$0xff]
      %v651 = vld [vmem:[%s5 + $0x30] sm:$0xff]
      %v652 = vld [vmem:[%s5 + $0x38] sm:$0xff]
      %v653 = vld [vmem:[%s6] sm:$0x1]
      %v655 = vlaneseq
      %v656 = vshrl.u32 %v655, 7
      %v657 = vsub.s32 0, %v656
      %v658 = vrot.slane %v653, %v657
      %vm660 = vcmask 523264
      %v662 = vsel %vm660, %v641, 0
      %v665 = vsel %vm660, %v642, 0
      %v668 = vsel %vm660, %v643, 0
      %v671 = vsel %vm660, %v644, 0
      %673 = vmatprep.subr.mxu0 0.0
      %674 = vmatpush1.msra.mxu0 0.0
      %675 = vmatprep.subr.mxu0 0.0
      %676 = vmatpush1.msra.mxu0 0.0
      %677 = vmatprep.subr.mxu0 0.0
      %678 = vmatpush1.msra.mxu0 0.0
      %679 = vmatprep.subr.mxu0 0.0
      %680 = vmatpush1.msra.mxu0 0.0
      %681 = vmatprep.subr.mxu0 0.0
      %682 = vmatpush1.msra.mxu0 0.0
      %683 = vmatprep.subr.mxu0 0.0
      %684 = vmatpush1.msra.mxu0 0.0
      %685 = vmatprep.subr.mxu0 0.0
      %686 = vmatpush1.msra.mxu0 0.0
      %687 = vmatprep.subr.mxu0 0.0
      %688 = vmatpush1.msra.mxu0 0.0
      %689 = vmatprep.subr.mxu0 0.0
      %690 = vmatpush1.msra.mxu0 %v652
      %691 = vmatprep.subr.mxu0 0.0
      %692 = vmatpush1.msra.mxu0 %v651
      %693 = vmatprep.subr.mxu0 0.0
      %694 = vmatpush1.msra.mxu0 %v650
      %695 = vmatprep.subr.mxu0 0.0
      %696 = vmatpush1.msra.mxu0 %v649
      %697 = vmatprep.subr.mxu0 0.0
      %698 = vmatpush1.msra.mxu0 %v648
      %699 = vmatprep.subr.mxu0 0.0
      %700 = vmatpush1.msra.mxu0 %v647
      %701 = vmatprep.subr.mxu0 0.0
      %702 = vmatpush1.msra.mxu0 %v646
      %703 = vmatprep.subr.mxu0 0.0
      %704 = vmatpush1.msra.mxu0 %v645
      %705 = vmatprep.subr.mxu0 0.0
      %706 = vmatpush2.msra.mxu0 0.0
      %707 = vmatprep.subr.mxu0 0.0
      %708 = vmatpush2.msra.mxu0 0.0
      %709 = vmatprep.subr.mxu0 0.0
      %710 = vmatpush2.msra.mxu0 0.0
      %711 = vmatprep.subr.mxu0 0.0
      %712 = vmatpush2.msra.mxu0 0.0
      %713 = vmatprep.subr.mxu0 0.0
      %714 = vmatpush2.msra.mxu0 0.0
      %715 = vmatprep.subr.mxu0 0.0
      %716 = vmatpush2.msra.mxu0 0.0
      %717 = vmatprep.subr.mxu0 0.0
      %718 = vmatpush2.msra.mxu0 0.0
      %719 = vmatprep.subr.mxu0 0.0
      %720 = vmatpush2.msra.mxu0 0.0
      %721 = vmatprep.subr.mxu0 0.0
      %722 = vmatpush2.msra.mxu0 0.0
      %723 = vmatprep.subr.mxu0 0.0
      %724 = vmatpush2.msra.mxu0 0.0
      %725 = vmatprep.subr.mxu0 0.0
      %726 = vmatpush2.msra.mxu0 0.0
      %727 = vmatprep.subr.mxu0 0.0
      %728 = vmatpush2.msra.mxu0 0.0
      %729 = vmatprep.subr.mxu0 0.0
      %730 = vmatpush2.msra.mxu0 0.0
      %731 = vmatprep.subr.mxu0 0.0
      %732 = vmatpush2.msra.mxu0 0.0
      %733 = vmatprep.subr.mxu0 0.0
      %734 = vmatpush2.msra.mxu0 0.0
      %735 = vmatprep.subr.mxu0 0.0
      %736 = vmatpush2.msra.mxu0 0.0
      %737 = vmatprep.mubr.f32.mxu0 0.0
      %738 = vmatmul.mubr.f32.gmra.mxu0 %v662
      %v739 = vpop.f32.mrf.mxu0
      %v740 = vadd.f32 %v658, %v739
      %v741 = vpop.f32.mrf.mxu0
      %742 = vmatprep.mubr.f32.mxu0 0.0
      %743 = vmatmul.mubr.f32.gmra.mxu0 %v665
      %v744 = vpop.f32.mrf.mxu0
      %v745 = vadd.f32 %v658, %v744
      %v746 = vpop.f32.mrf.mxu0
      %747 = vmatprep.mubr.f32.mxu0 0.0
      %748 = vmatmul.mubr.f32.gmra.mxu0 %v668
      %v749 = vpop.f32.mrf.mxu0
      %v750 = vadd.f32 %v658, %v749
      %v751 = vpop.f32.mrf.mxu0
      %752 = vmatprep.mubr.f32.mxu0 0.0
      %753 = vmatmul.mubr.f32.gmra.mxu0 %v671
      %v754 = vpop.f32.mrf.mxu0
      %v755 = vadd.f32 %v658, %v754
      %v756 = vpop.f32.mrf.mxu0
      %757 = vdwg.mxu0
      %vm758 = vcmask 261120
      %759 = vst.msk [vmem:[%s283] sm:$0xff] %vm758, %v740
      %760 = vst.msk [vmem:[%s283 + $0x8] sm:$0xff] %vm758, %v745
      %761 = vst.msk [vmem:[%s283 + $0x10] sm:$0xff] %vm758, %v750
      %762 = vst.msk [vmem:[%s283 + $0x18] sm:$0xff] %vm758, %v755
      %s763 = smul.u32 4, %s18
      %p764 = scmp.lt.s32.totalorder %s763, 7
      %s765 = scalar_select %p764, %s763, 7
      %s766 = smul.addr %s765, 8
      %s767 = scalar_lea.vmem %s7, %s766
      // Predicated region
      $region49: #{out_forward.1} parent=47 // pred_check
        %p768 = pneg %p188
      $region50: #{out_forward.1} parent=47 // pred_check_branch
        %770 = sbr.rel (%p768) target = $region52
      $region51: #{out_forward.1} parent=47 // pred_region
        %s771 = smul.u32 4, %s18
      $region52: #{out_forward.1} parent=47 // pred_fallthru
        _
    $region48: #{out_forward.1} parent=5 // pred_fallthru
      _
    %p772 = scmp.le.s32.totalorder 2, %s13
    // Predicated region
    $region53: #{out_forward.1} parent=5 // pred_check
      %p773 = pneg %p772
    $region54: #{out_forward.1} parent=5 // pred_check_branch
      %775 = sbr.rel (%p773) target = $region56
    $region55: #{out_forward.1} parent=5 // pred_region
      %s776 = ssub.s32 %s13, 2
      // Predicated region
      $region57: #{out_forward.1} parent=55 // pred_check
        %p777 = pneg %p194
      $region58: #{out_forward.1} parent=55 // pred_check_branch
        %779 = sbr.rel (%p777) target = $region60
      $region59: #{out_forward.1} parent=55 // pred_region
        %s780 = smul.u32 4, %s19
        %p781 = scmp.lt.s32.totalorder %s780, 7
        %s782 = scalar_select %p781, %s780, 7
        %s783 = smul.addr %s782, 8
        %s784 = scalar_lea.vmem %s7, %s783
      $region60: #{out_forward.1} parent=55 // pred_fallthru
        _
    $region56: #{out_forward.1} parent=5 // pred_fallthru
      _
  $region6: #{out_forward.1} parent=0 // loop_footer
    %s17 = sadd.s32 1, %s13
  $region7: #{out_forward.1} parent=0 // loop_footer_branch
    %12 = sbr.rel target = $region3
  $region8: #{out_forward.1} parent=0 // loop_exit
    _

</llo_original>
